<compile_context>
chip_gen: v6e
topology: v6e:2x2x1
jax: 0.10.0
libtpu: 0.0.40
codegen_flags: <defaults>
</compile_context>

<pallas_src>
import functools
import math

import jax
import jax.numpy as jnp
from jax import lax
from jax.experimental import pallas as pl
from jax.experimental.pallas import tpu as pltpu

_LANES = 128


def _round_up(x, m):
    return ((x + m - 1) // m) * m


def _vmem_limit_bytes():
    # Generation-aware scoped-VMEM limit: ~55% of physical VMEM, i.e. ~35 MiB
    # on v7x (64 MiB physical) and ~70 MiB on v5e/v6e (128 MiB physical).
    try:
        cap = int(getattr(pltpu.get_tpu_info(), "vmem_capacity_bytes",
                          64 * 1024 * 1024))
    except Exception:
        cap = 64 * 1024 * 1024          # unknown -> assume smallest (v7x)
    return max(32 * 1024 * 1024, min(int(cap * 0.55), 96 * 1024 * 1024))


_VMEM_LIMIT = _vmem_limit_bytes()


# ----------------------------------------------------------------------------
# Fused backbone stand-in (1x1 conv + ReLU) + DETR.input_proj (1x1 conv)
# ----------------------------------------------------------------------------
def _backbone_proj_kernel(x_ref, bw_ref, bb_ref, pw_ref, pb_ref, src_ref):
    x = x_ref[...]                                                  # (tm, Cin)
    feat = jnp.dot(x, bw_ref[...],
                   preferred_element_type=jnp.float32) + bb_ref[...]
    feat = jnp.maximum(feat, 0.0).astype(x.dtype)                   # (tm, Cb)
    src = jnp.dot(feat, pw_ref[...],
                  preferred_element_type=jnp.float32) + pb_ref[...]
    src_ref[...] = src.astype(src_ref.dtype)


def pallas_backbone_proj(x, bw, bb, pw, pb, *, tile_m=512,
                         out_dtype=jnp.bfloat16):
    """src = (relu(x @ bw + bb)) @ pw + pb, streamed in row tiles.

    x:(M, C_in) -> (M, D).  The `feat` intermediate stays in VMEM.
    """
    M, C_in = x.shape
    Cb = bw.shape[1]
    D = pw.shape[1]

    # Pad the tiny RGB contraction to a sublane multiple (v5e layout fix).
    Kp = _round_up(C_in, 8)
    if Kp != C_in:
        x = jnp.pad(x, ((0, 0), (0, Kp - C_in)))
        bw = jnp.pad(bw, ((0, Kp - C_in), (0, 0)))

    # Lane-dense output (unmasked full-width stores); sliced back in JAX.
    Np = _round_up(D, _LANES)
    if Np != D:
        pw = jnp.pad(pw, ((0, 0), (0, Np - D)))
        pb = jnp.pad(pb, ((0, Np - D),))

    tile_m = min(tile_m, _round_up(M, 8))
    Mp = _round_up(M, tile_m)
    if Mp != M:
        x = jnp.pad(x, ((0, Mp - M), (0, 0)))
    x = x.astype(jnp.bfloat16)

    out = pl.pallas_call(
        _backbone_proj_kernel,
        out_shape=jax.ShapeDtypeStruct((Mp, Np), out_dtype),
        grid_spec=pltpu.PrefetchScalarGridSpec(
            num_scalar_prefetch=0,
            grid=(Mp // tile_m,),
            in_specs=[
                pl.BlockSpec((tile_m, Kp), lambda i: (i, 0)),
                pl.BlockSpec((Kp, Cb), lambda i: (0, 0)),    # weights resident
                pl.BlockSpec((1, Cb), lambda i: (0, 0)),
                pl.BlockSpec((Cb, Np), lambda i: (0, 0)),
                pl.BlockSpec((1, Np), lambda i: (0, 0)),
            ],
            out_specs=pl.BlockSpec((tile_m, Np), lambda i: (i, 0)),
        ),
        compiler_params=pltpu.CompilerParams(
            dimension_semantics=("parallel",),
            vmem_limit_bytes=_VMEM_LIMIT),
    )(x,
      bw.astype(jnp.bfloat16), bb.astype(jnp.float32).reshape(1, Cb),
      pw.astype(jnp.bfloat16), pb.astype(jnp.float32).reshape(1, Np))
    return out[:M, :D]


# ----------------------------------------------------------------------------
# Fused DETR heads: class_embed Linear + bbox_embed 3-layer MLP + sigmoid
# ----------------------------------------------------------------------------
def _heads_kernel(x_ref, cw_ref, cb_ref, w1_ref, b1_ref, w2_ref, b2_ref,
                  w3_ref, b3_ref, logits_ref, boxes_ref):
    x = x_ref[...]                                                  # (tm, D)
    logits = jnp.dot(x, cw_ref[...],
                     preferred_element_type=jnp.float32) + cb_ref[...]
    h = jnp.dot(x, w1_ref[...],
                preferred_element_type=jnp.float32) + b1_ref[...]
    h = jnp.maximum(h, 0.0).astype(x.dtype)
    h = jnp.dot(h, w2_ref[...],
                preferred_element_type=jnp.float32) + b2_ref[...]
    h = jnp.maximum(h, 0.0).astype(x.dtype)
    y = jnp.dot(h, w3_ref[...],
                preferred_element_type=jnp.float32) + b3_ref[...]
    logits_ref[...] = logits.astype(logits_ref.dtype)
    boxes_ref[...] = jax.nn.sigmoid(y).astype(boxes_ref.dtype)


def pallas_heads(x, cls_w, cls_b, w1, b1, w2, b2, w3, b3, *, tile_m=512):
    """Returns (logits (M, n_cls), boxes (M, 4)) from x:(M, hidden)."""
    M, D = x.shape
    n_cls = cls_w.shape[1]
    n_box = w3.shape[1]
    H = w1.shape[1]

    def pad_out(wm, bv):
        n = wm.shape[1]
        npad = _round_up(n, _LANES)
        wm = jnp.pad(wm, ((0, 0), (0, npad - n))).astype(jnp.bfloat16)
        bv = jnp.pad(bv, ((0, npad - n),)).astype(jnp.float32).reshape(1, npad)
        return wm, bv, npad

    cls_wp, cls_bp, NC = pad_out(cls_w, cls_b)    # lane-dense class output
    w3p, b3p, NB = pad_out(w3, b3)                # lane-dense box output

    tile_m = min(tile_m, _round_up(M, 8))
    Mp = _round_up(M, tile_m)
    if Mp != M:
        x = jnp.pad(x, ((0, Mp - M), (0, 0)))
    x = x.astype(jnp.bfloat16)

    logits, boxes = pl.pallas_call(
        _heads_kernel,
        out_shape=(jax.ShapeDtypeStruct((Mp, NC), jnp.float32),
                   jax.ShapeDtypeStruct((Mp, NB), jnp.float32)),
        grid_spec=pltpu.PrefetchScalarGridSpec(
            num_scalar_prefetch=0,
            grid=(Mp // tile_m,),
            in_specs=[
                pl.BlockSpec((tile_m, D), lambda i: (i, 0)),
                pl.BlockSpec((D, NC), lambda i: (0, 0)),
                pl.BlockSpec((1, NC), lambda i: (0, 0)),
                pl.BlockSpec((D, H), lambda i: (0, 0)),
                pl.BlockSpec((1, H), lambda i: (0, 0)),
                pl.BlockSpec((H, H), lambda i: (0, 0)),
                pl.BlockSpec((1, H), lambda i: (0, 0)),
                pl.BlockSpec((H, NB), lambda i: (0, 0)),
                pl.BlockSpec((1, NB), lambda i: (0, 0)),
            ],
            out_specs=(pl.BlockSpec((tile_m, NC), lambda i: (i, 0)),
                       pl.BlockSpec((tile_m, NB), lambda i: (i, 0))),
        ),
        compiler_params=pltpu.CompilerParams(
            dimension_semantics=("parallel",),
            vmem_limit_bytes=_VMEM_LIMIT),
    )(x, cls_wp, cls_bp,
      w1.astype(jnp.bfloat16), b1.astype(jnp.float32).reshape(1, H),
      w2.astype(jnp.bfloat16), b2.astype(jnp.float32).reshape(1, H),
      w3p, b3p)
    return logits[:M, :n_cls], boxes[:M, :n_box]


# ----------------------------------------------------------------------------
# Fused multi-layer decoder stand-in (residual cross-attention)
# ----------------------------------------------------------------------------
def _decoder_kernel(q_embed_ref, mem_ref, pos_ref, bias_ref, hs_ref,
                    tgt_ref, k_ref, *, scale, num_layers):
    # grid = (B, q_tiles, L); L is the inner "arbitrary" axis.  memory / bias
    # blocks depend only on b, so they stay VMEM-resident across q tiles and
    # layers.  K = memory + pos is built once per (b, qt) at l == 0 into VMEM
    # scratch (k_in is never materialized in HBM).
    l = pl.program_id(2)

    @pl.when(l == 0)
    def _():
        tgt_ref[...] = jnp.zeros_like(tgt_ref)
        k_ref[...] = (mem_ref[0].astype(jnp.float32)
                      + pos_ref[...]).astype(k_ref.dtype)

    q = (tgt_ref[...] + q_embed_ref[...]).astype(jnp.bfloat16)      # (Qt, D)
    k = k_ref[...]                                                  # (S, D)
    v = mem_ref[0]                                                  # (S, D)

    # Contract last dims of q and k directly -> no explicit k.T (XLU) copy.
    s = lax.dot_general(q, k, (((1,), (1,)), ((), ())),
                        preferred_element_type=jnp.float32) * scale
    s = s + bias_ref[0]                                             # (1, S)
    m = jnp.max(s, axis=-1, keepdims=True)
    p = jnp.exp(s - m)
    denom = jnp.sum(p, axis=-1, keepdims=True)
    # TODO(synk): for very large S (realistic feature maps on v5e) this could
    # be chunked flash-style over S to bound the f32 (Q, S) live set.
    attn = jnp.dot(p.astype(jnp.bfloat16), v,
                   preferred_element_type=jnp.float32)
    attn = attn * pl.reciprocal(denom, approx=True)                 # EUP slot
    tgt_new = tgt_ref[...] + attn
    tgt_ref[...] = tgt_new

    @pl.when(l == num_layers - 1)
    def _():
        hs_ref[...] = tgt_new[None, :, :].astype(hs_ref.dtype)


def pallas_decoder(query_embed, memory, pos, bias, num_layers):
    """Fused L-layer single-head cross-attention decoder stand-in.

    query_embed:(Q,D)  memory:(B,S,D)  pos:(S,D)  bias:(B,1,S)
    Returns hs of the LAST layer only, shape (B, Q, D), bf16.
    """
    # TODO(synk): the real DETR transformer (6-layer encoder/decoder MHA+FFN)
    # is an injected module; this stand-in keeps only residual cross-attention.
    B, S, D = memory.shape
    Q = query_embed.shape[0]
    scale = 1.0 / math.sqrt(D)

    # Pad queries to sublane multiples; split into tiles so a second parallel
    # grid axis exists (keeps both v7x TensorCores busy at small batch).
    q_tile = 64 if Q > 64 else _round_up(Q, 8)
    Qp = _round_up(Q, q_tile)
    n_qt = Qp // q_tile
    qe = jnp.pad(query_embed.astype(jnp.float32), ((0, Qp - Q), (0, 0)))

    hs = pl.pallas_call(
        functools.partial(_decoder_kernel, scale=scale, num_layers=num_layers),
        out_shape=jax.ShapeDtypeStruct((B, Qp, D), jnp.bfloat16),
        grid_spec=pltpu.PrefetchScalarGridSpec(
            num_scalar_prefetch=0,
            grid=(B, n_qt, num_layers),
            in_specs=[
                pl.BlockSpec((q_tile, D), lambda b, qt, l: (qt, 0)),
                pl.BlockSpec((1, S, D), lambda b, qt, l: (b, 0, 0)),
                pl.BlockSpec((S, D), lambda b, qt, l: (0, 0)),
                pl.BlockSpec((1, 1, S), lambda b, qt, l: (b, 0, 0)),
            ],
            out_specs=pl.BlockSpec((1, q_tile, D),
                                   lambda b, qt, l: (b, qt, 0)),
            scratch_shapes=[pltpu.VMEM((q_tile, D), jnp.float32),
                            pltpu.VMEM((S, D), jnp.bfloat16)],
        ),
        compiler_params=pltpu.CompilerParams(
            dimension_semantics=("parallel", "parallel", "arbitrary"),
            vmem_limit_bytes=_VMEM_LIMIT),
    )(qe,
      memory.astype(jnp.bfloat16),
      pos.astype(jnp.float32),
      bias.astype(jnp.float32))
    return hs[:, :Q, :]


# ----------------------------------------------------------------------------
# Glue (plain JAX): positional encoding, parameter init, model wiring
# ----------------------------------------------------------------------------
def sine_pos_embed(H, W, D):
    """Simplified DETR-style sine positional embedding, shape (H*W, D).

    Assumes (D // 2) is even (true for real DETR hidden dims and this test).
    """
    half = D // 2
    dim_t = 10000.0 ** (2.0 * (jnp.arange(half) // 2) / half)
    ys = jnp.arange(1, H + 1, dtype=jnp.float32) / H * 2.0 * math.pi
    xs = jnp.arange(1, W + 1, dtype=jnp.float32) / W * 2.0 * math.pi
    py = ys[:, None] / dim_t                     # (H, half)
    px = xs[:, None] / dim_t                     # (W, half)

    def interleave(p):
        return jnp.stack([jnp.sin(p[:, 0::2]), jnp.cos(p[:, 1::2])],
                         axis=2).reshape(p.shape[0], -1)

    py = interleave(py)
    px = interleave(px)
    pos = jnp.concatenate([
        jnp.broadcast_to(py[:, None, :], (H, W, half)),
        jnp.broadcast_to(px[None, :, :], (H, W, half)),
    ], axis=-1)
    return pos.reshape(H * W, D).astype(jnp.float32)


def init_params(key, in_ch, backbone_ch, hidden, num_classes, num_queries):
    ks = jax.random.split(key, 8)
    s = 0.02

    def w(k, shape):
        return jax.random.normal(k, shape, jnp.float32) * s

    return {
        # backbone stand-in: 1x1 conv in_ch -> backbone_ch
        "backbone_w": w(ks[0], (in_ch, backbone_ch)),
        "backbone_b": jnp.zeros((backbone_ch,), jnp.float32),
        # DETR.input_proj: Conv2d(backbone_ch, hidden, kernel_size=1)
        "proj_w": w(ks[1], (backbone_ch, hidden)),
        "proj_b": jnp.zeros((hidden,), jnp.float32),
        # DETR.query_embed: nn.Embedding(num_queries, hidden)
        "query_embed": w(ks[2], (num_queries, hidden)),
        # DETR.class_embed: Linear(hidden, num_classes + 1)
        "cls_w": w(ks[3], (hidden, num_classes + 1)),
        "cls_b": jnp.zeros((num_classes + 1,), jnp.float32),
        # DETR.bbox_embed: MLP(hidden, hidden, 4, 3)
        "bbox_w1": w(ks[4], (hidden, hidden)),
        "bbox_b1": jnp.zeros((hidden,), jnp.float32),
        "bbox_w2": w(ks[5], (hidden, hidden)),
        "bbox_b2": jnp.zeros((hidden,), jnp.float32),
        "bbox_w3": w(ks[6], (hidden, 4)),
        "bbox_b3": jnp.zeros((4,), jnp.float32),
    }


def detr_forward(params, samples, mask, *, hidden, num_queries, num_dec_layers):
    """samples: (B, 3, H, W) NCHW float32; mask: (B, H, W) bool (True = pad)."""
    B, C_in, H, W = samples.shape
    HW = H * W

    # ---- backbone stand-in + DETR.input_proj, fused (no feat HBM round trip)
    x_rows = jnp.transpose(samples, (0, 2, 3, 1)).reshape(B * HW, C_in)
    src = pallas_backbone_proj(x_rows,
                               params["backbone_w"], params["backbone_b"],
                               params["proj_w"], params["proj_b"])   # (B*HW, D)
    memory = src.reshape(B, HW, hidden)                              # bf16

    pos = sine_pos_embed(H, W, hidden)                               # (HW, D)

    # key-padding mask -> additive bias on attention scores
    bias = jnp.where(mask.reshape(B, 1, HW), -1e9, 0.0).astype(jnp.float32)

    # ---- fused decoder stand-in (all layers; only last layer emitted) -------
    hs_last = pallas_decoder(params["query_embed"], memory, pos, bias,
                             num_dec_layers)                         # (B, Q, D)

    # ---- DETR heads (class Linear + bbox MLP fused), last layer only --------
    flat = hs_last.reshape(B * num_queries, hidden)
    logits, boxes = pallas_heads(flat,
                                 params["cls_w"], params["cls_b"],
                                 params["bbox_w1"], params["bbox_b1"],
                                 params["bbox_w2"], params["bbox_b2"],
                                 params["bbox_w3"], params["bbox_b3"])
    pred_logits = logits.reshape(B, num_queries, -1)
    pred_boxes = boxes.reshape(B, num_queries, 4)

    # TODO(synk): aux_outputs (per-layer heads) are not emitted; only the last
    # decoder layer is consumed, matching DETR(aux_loss=False).
    return {"pred_logits": pred_logits, "pred_boxes": pred_boxes}


# ----------------------------------------------------------------------------
if __name__ == "__main__":
    B, C_in, H, W = 2, 3, 16, 16
    backbone_ch = 8
    hidden = 32
    num_queries = 8
    num_classes = 5
    num_dec_layers = 2

    key = jax.random.PRNGKey(0)
    k_img, k_par = jax.random.split(key)
    samples = jax.random.normal(k_img, (B, C_in, H, W), jnp.float32)
    mask = jnp.zeros((B, H, W), dtype=bool)      # no padded pixels

    params = init_params(k_par, C_in, backbone_ch, hidden, num_classes,
                         num_queries)

    out = detr_forward(params, samples, mask, hidden=hidden,
                       num_queries=num_queries, num_dec_layers=num_dec_layers)
    jax.block_until_ready(out)

    assert out["pred_logits"].shape == (B, num_queries, num_classes + 1)
    assert out["pred_boxes"].shape == (B, num_queries, 4)
    assert bool(jnp.all(jnp.isfinite(out["pred_logits"])))
    assert bool(jnp.all((out["pred_boxes"] >= 0) & (out["pred_boxes"] <= 1)))
    print("KERNEL_OK")
</pallas_src>

<mosaic_0001>
module attributes {stable_mosaic.version = 11 : i64} {
  func.func @_backbone_proj_kernel(%arg0: i32, %arg1: memref<512x8xbf16, #tpu.memory_space<vmem>>, %arg2: memref<8x8xbf16, #tpu.memory_space<vmem>>, %arg3: memref<1x8xf32, #tpu.memory_space<vmem>>, %arg4: memref<8x128xbf16, #tpu.memory_space<vmem>>, %arg5: memref<1x128xf32, #tpu.memory_space<vmem>>, %arg6: memref<512x128xbf16, #tpu.memory_space<vmem>>) attributes {dimension_semantics = [#tpu.dimension_semantics<parallel>], iteration_bounds = array<i64: 1>, scalar_prefetch = 0 : i64, scratch_operands = 0 : i64, tpu.core_type = #tpu.core_type<tc>, window_params = [{transform_indices = @transform_0, window_bounds = array<i64: 512, 8>}, {pipeline_mode = #tpu.pipeline_mode<synchronous>, transform_indices = @transform_1, window_bounds = array<i64: 8, 8>}, {pipeline_mode = #tpu.pipeline_mode<synchronous>, transform_indices = @transform_2, window_bounds = array<i64: 1, 8>}, {pipeline_mode = #tpu.pipeline_mode<synchronous>, transform_indices = @transform_3, window_bounds = array<i64: 8, 128>}, {pipeline_mode = #tpu.pipeline_mode<synchronous>, transform_indices = @transform_4, window_bounds = array<i64: 1, 128>}, {transform_indices = @transform_5, window_bounds = array<i64: 512, 128>}]} {
    %c0 = arith.constant 0 : index
    %c0_0 = arith.constant 0 : index
    %0 = vector.load %arg1[%c0, %c0_0] : memref<512x8xbf16, #tpu.memory_space<vmem>>, vector<512x8xbf16>
    %c0_1 = arith.constant 0 : index
    %c0_2 = arith.constant 0 : index
    %1 = vector.load %arg2[%c0_1, %c0_2] : memref<8x8xbf16, #tpu.memory_space<vmem>>, vector<8x8xbf16>
    %cst = arith.constant dense<0.000000e+00> : vector<512x8xf32>
    %2 = tpu.matmul %0, %1, %cst {dimension_numbers = #tpu.dot_dimension_numbers<[1], [0], [0], [1], [0, 0, 1, 1], [], []>} : vector<512x8xbf16>, vector<8x8xbf16>, vector<512x8xf32> -> vector<512x8xf32>
    %c0_3 = arith.constant 0 : index
    %c0_4 = arith.constant 0 : index
    %3 = vector.load %arg3[%c0_3, %c0_4] : memref<1x8xf32, #tpu.memory_space<vmem>>, vector<1x8xf32>
    %4 = vector.broadcast %3 : vector<1x8xf32> to vector<512x8xf32>
    %5 = arith.addf %2, %4 : vector<512x8xf32>
    %cst_5 = arith.constant 0.000000e+00 : f32
    %6 = vector.broadcast %cst_5 : f32 to vector<512x8xf32>
    %7 = arith.maximumf %5, %6 : vector<512x8xf32>
    %8 = arith.truncf %7 : vector<512x8xf32> to vector<512x8xbf16>
    %c0_6 = arith.constant 0 : index
    %c0_7 = arith.constant 0 : index
    %9 = vector.load %arg4[%c0_6, %c0_7] : memref<8x128xbf16, #tpu.memory_space<vmem>>, vector<8x128xbf16>
    %cst_8 = arith.constant dense<0.000000e+00> : vector<512x128xf32>
    %10 = tpu.matmul %8, %9, %cst_8 {dimension_numbers = #tpu.dot_dimension_numbers<[1], [0], [0], [1], [0, 0, 1, 1], [], []>} : vector<512x8xbf16>, vector<8x128xbf16>, vector<512x128xf32> -> vector<512x128xf32>
    %c0_9 = arith.constant 0 : index
    %c0_10 = arith.constant 0 : index
    %11 = vector.load %arg5[%c0_9, %c0_10] : memref<1x128xf32, #tpu.memory_space<vmem>>, vector<1x128xf32>
    %12 = vector.broadcast %11 : vector<1x128xf32> to vector<512x128xf32>
    %13 = arith.addf %10, %12 : vector<512x128xf32>
    %14 = arith.truncf %13 : vector<512x128xf32> to vector<512x128xbf16>
    %c0_11 = arith.constant 0 : index
    %c0_12 = arith.constant 0 : index
    %15 = vector.load %arg6[%c0_11, %c0_12] : memref<512x128xbf16, #tpu.memory_space<vmem>>, vector<512x128xbf16>
    tpu.vector_store %arg6[%c0_11, %c0_12], %14 {strides = array<i32>} : memref<512x128xbf16, #tpu.memory_space<vmem>>, vector<512x128xbf16>,
    return
  }
  func.func @transform_0(%arg0: i32) -> (i32, i32) {
    %c0_i32 = arith.constant 0 : i32
    %c0_i32_0 = arith.constant 0 : i32
    return %arg0, %c0_i32 : i32, i32
  }
  func.func @transform_1(%arg0: i32) -> (i32, i32) {
    %c0_i32 = arith.constant 0 : i32
    %c0_i32_0 = arith.constant 0 : i32
    %c0_i32_1 = arith.constant 0 : i32
    return %c0_i32, %c0_i32_0 : i32, i32
  }
  func.func @transform_2(%arg0: i32) -> (i32, i32) {
    %c0_i32 = arith.constant 0 : i32
    %c0_i32_0 = arith.constant 0 : i32
    %c0_i32_1 = arith.constant 0 : i32
    return %c0_i32, %c0_i32_0 : i32, i32
  }
  func.func @transform_3(%arg0: i32) -> (i32, i32) {
    %c0_i32 = arith.constant 0 : i32
    %c0_i32_0 = arith.constant 0 : i32
    %c0_i32_1 = arith.constant 0 : i32
    return %c0_i32, %c0_i32_0 : i32, i32
  }
  func.func @transform_4(%arg0: i32) -> (i32, i32) {
    %c0_i32 = arith.constant 0 : i32
    %c0_i32_0 = arith.constant 0 : i32
    %c0_i32_1 = arith.constant 0 : i32
    return %c0_i32, %c0_i32_0 : i32, i32
  }
  func.func @transform_5(%arg0: i32) -> (i32, i32) {
    %c0_i32 = arith.constant 0 : i32
    %c0_i32_0 = arith.constant 0 : i32
    return %arg0, %c0_i32 : i32, i32
  }
}

</mosaic_0001>

<llo_original>
// kernel: tpu_custom_call.1
$region0: #{tpu_custom_call.1}
  #allocation0 [shape = 'u32[]', space=smem, size = 0x4, offset = 0x4, fixed_abs, tag = 'smem constant byte address 0x4 - core index']
  #allocation1 [shape = 'u32[144,128]{1,0:T(1,128)}', space=vmem, size = 0x12000, scoped, tag = 'internal scratch']
  %s0 = inlined_call_operand.vmem [shape: bf16[512,8], index: 0, kind: input, shape index: {}]
  %s1 = inlined_call_operand.vmem [shape: bf16[8,8], index: 1, kind: input, shape index: {}]
  %s2 = inlined_call_operand.vmem [shape: f32[1,8], index: 2, kind: input, shape index: {}]
  %s3 = inlined_call_operand.vmem [shape: bf16[8,128], index: 3, kind: input, shape index: {}]
  %s4 = inlined_call_operand.vmem [shape: f32[1,128], index: 4, kind: input, shape index: {}]
  %s5 = inlined_call_operand.hbm [shape: bf16[512,128], index: 5, kind: output, shape index: {}]
  %s6 = sld [smem:[#allocation0]]
  $region30: #{tpu_custom_call.1} parent=0
    _
  %s8 = ssub.s32 1, %s6
  %s9 = scalar_select 0, %s8, %s6
  $region1: #{tpu_custom_call.1} parent=0
    #allocation2 [shape = 'u8[131072]{0}', space=vmem, size = 0x20000, scoped, tag = 'output window, operand 0, single buffered']
    #allocation3 [shape = 's32[1]{0}', space=sflag, size = 0x4, scoped, tag = 'scoped memory for tpu_custom_call.1']
    %10 = vsyncpa [#allocation3], 0
    // Predicated region
    $region2: #{tpu_custom_call.1} parent=1 // pred_check
      _
    $region3: #{tpu_custom_call.1} parent=1 // pred_check_branch
      %12 = sbr.rel (0) target = $region5
    $region4: #{tpu_custom_call.1} parent=1 // pred_region
      _
    $region5: #{tpu_custom_call.1} parent=1 // pred_fallthru
      _
    // Predicated region
    $region6: #{tpu_custom_call.1} parent=1 // pred_check
      _
    $region7: #{tpu_custom_call.1} parent=1 // pred_check_branch
      %14 = sbr.rel (0) target = $region9
    $region8: #{tpu_custom_call.1} parent=1 // pred_region
      _
    $region9: #{tpu_custom_call.1} parent=1 // pred_fallthru
      _
    // Predicated region
    $region10: #{tpu_custom_call.1} parent=1 // pred_check
      _
    $region11: #{tpu_custom_call.1} parent=1 // pred_check_branch
      %16 = sbr.rel (0) target = $region13
    $region12: #{tpu_custom_call.1} parent=1 // pred_region
      _
    $region13: #{tpu_custom_call.1} parent=1 // pred_fallthru
      _
    // Predicated region
    $region14: #{tpu_custom_call.1} parent=1 // pred_check
      _
    $region15: #{tpu_custom_call.1} parent=1 // pred_check_branch
      %18 = sbr.rel (0) target = $region17
    $region16: #{tpu_custom_call.1} parent=1 // pred_region
      _
    $region17: #{tpu_custom_call.1} parent=1 // pred_fallthru
      _
    // Predicated region
    $region18: #{tpu_custom_call.1} parent=1 // pred_check
      _
    $region19: #{tpu_custom_call.1} parent=1 // pred_check_branch
      %20 = sbr.rel (0) target = $region21
    $region20: #{tpu_custom_call.1} parent=1 // pred_region
      _
    $region21: #{tpu_custom_call.1} parent=1 // pred_fallthru
      _
    %v22 = vld [vmem:[%s0] sm:$0xf]
    %v23 = vld [vmem:[%s0 + $0x4] sm:$0xf]
    %v24 = vld [vmem:[%s0 + $0x8] sm:$0xf]
    %v25 = vld [vmem:[%s0 + $0xc] sm:$0xf]
    %v26 = vld [vmem:[%s0 + $0x10] sm:$0xf]
    %v27 = vld [vmem:[%s0 + $0x14] sm:$0xf]
    %v28 = vld [vmem:[%s0 + $0x18] sm:$0xf]
    %v29 = vld [vmem:[%s0 + $0x1c] sm:$0xf]
    %v30 = vld [vmem:[%s0 + $0x20] sm:$0xf]
    %v31 = vld [vmem:[%s0 + $0x24] sm:$0xf]
    %v32 = vld [vmem:[%s0 + $0x28] sm:$0xf]
    %v33 = vld [vmem:[%s0 + $0x2c] sm:$0xf]
    %v34 = vld [vmem:[%s0 + $0x30] sm:$0xf]
    %v35 = vld [vmem:[%s0 + $0x34] sm:$0xf]
    %v36 = vld [vmem:[%s0 + $0x38] sm:$0xf]
    %v37 = vld [vmem:[%s0 + $0x3c] sm:$0xf]
    %v38 = vld [vmem:[%s0 + $0x40] sm:$0xf]
    %v39 = vld [vmem:[%s0 + $0x44] sm:$0xf]
    %v40 = vld [vmem:[%s0 + $0x48] sm:$0xf]
    %v41 = vld [vmem:[%s0 + $0x4c] sm:$0xf]
    %v42 = vld [vmem:[%s0 + $0x50] sm:$0xf]
    %v43 = vld [vmem:[%s0 + $0x54] sm:$0xf]
    %v44 = vld [vmem:[%s0 + $0x58] sm:$0xf]
    %v45 = vld [vmem:[%s0 + $0x5c] sm:$0xf]
    %v46 = vld [vmem:[%s0 + $0x60] sm:$0xf]
    %v47 = vld [vmem:[%s0 + $0x64] sm:$0xf]
    %v48 = vld [vmem:[%s0 + $0x68] sm:$0xf]
    %v49 = vld [vmem:[%s0 + $0x6c] sm:$0xf]
    %v50 = vld [vmem:[%s0 + $0x70] sm:$0xf]
    %v51 = vld [vmem:[%s0 + $0x74] sm:$0xf]
    %v52 = vld [vmem:[%s0 + $0x78] sm:$0xf]
    %v53 = vld [vmem:[%s0 + $0x7c] sm:$0xf]
    %v54 = vld [vmem:[%s0 + $0x80] sm:$0xf]
    %v55 = vld [vmem:[%s0 + $0x84] sm:$0xf]
    %v56 = vld [vmem:[%s0 + $0x88] sm:$0xf]
    %v57 = vld [vmem:[%s0 + $0x8c] sm:$0xf]
    %v58 = vld [vmem:[%s0 + $0x90] sm:$0xf]
    %v59 = vld [vmem:[%s0 + $0x94] sm:$0xf]
    %v60 = vld [vmem:[%s0 + $0x98] sm:$0xf]
    %v61 = vld [vmem:[%s0 + $0x9c] sm:$0xf]
    %v62 = vld [vmem:[%s0 + $0xa0] sm:$0xf]
    %v63 = vld [vmem:[%s0 + $0xa4] sm:$0xf]
    %v64 = vld [vmem:[%s0 + $0xa8] sm:$0xf]
    %v65 = vld [vmem:[%s0 + $0xac] sm:$0xf]
    %v66 = vld [vmem:[%s0 + $0xb0] sm:$0xf]
    %v67 = vld [vmem:[%s0 + $0xb4] sm:$0xf]
    %v68 = vld [vmem:[%s0 + $0xb8] sm:$0xf]
    %v69 = vld [vmem:[%s0 + $0xbc] sm:$0xf]
    %v70 = vld [vmem:[%s0 + $0xc0] sm:$0xf]
    %v71 = vld [vmem:[%s0 + $0xc4] sm:$0xf]
    %v72 = vld [vmem:[%s0 + $0xc8] sm:$0xf]
    %v73 = vld [vmem:[%s0 + $0xcc] sm:$0xf]
    %v74 = vld [vmem:[%s0 + $0xd0] sm:$0xf]
    %v75 = vld [vmem:[%s0 + $0xd4] sm:$0xf]
    %v76 = vld [vmem:[%s0 + $0xd8] sm:$0xf]
    %v77 = vld [vmem:[%s0 + $0xdc] sm:$0xf]
    %v78 = vld [vmem:[%s0 + $0xe0] sm:$0xf]
    %v79 = vld [vmem:[%s0 + $0xe4] sm:$0xf]
    %v80 = vld [vmem:[%s0 + $0xe8] sm:$0xf]
    %v81 = vld [vmem:[%s0 + $0xec] sm:$0xf]
    %v82 = vld [vmem:[%s0 + $0xf0] sm:$0xf]
    %v83 = vld [vmem:[%s0 + $0xf4] sm:$0xf]
    %v84 = vld [vmem:[%s0 + $0xf8] sm:$0xf]
    %v85 = vld [vmem:[%s0 + $0xfc] sm:$0xf]
    %v86 = vld [vmem:[%s1] sm:$0xf]
    %v87 = vld [vmem:[%s2] sm:$0x1]
    %v89 = vlaneseq
    %v90 = vshrl.u32 %v89, 7
    %v91 = vsub.s32 0, %v90
    %v92 = vrot.slane %v87, %v91
    %v158 = vunpack.c.l.b16 %v22
    %v159 = vunpack.c.l.b16 %v23
    %v160 = vunpack.c.l.b16 %v24
    %v161 = vunpack.c.l.b16 %v25
    %v162 = vunpack.c.l.b16 %v26
    %v163 = vunpack.c.l.b16 %v27
    %v164 = vunpack.c.l.b16 %v28
    %v165 = vunpack.c.l.b16 %v29
    %v166 = vunpack.c.l.b16 %v30
    %v167 = vunpack.c.l.b16 %v31
    %v168 = vunpack.c.l.b16 %v32
    %v169 = vunpack.c.l.b16 %v33
    %v170 = vunpack.c.l.b16 %v34
    %v171 = vunpack.c.l.b16 %v35
    %v172 = vunpack.c.l.b16 %v36
    %v173 = vunpack.c.l.b16 %v37
    %v174 = vunpack.c.l.b16 %v38
    %v175 = vunpack.c.l.b16 %v39
    %v176 = vunpack.c.l.b16 %v40
    %v177 = vunpack.c.l.b16 %v41
    %v178 = vunpack.c.l.b16 %v42
    %v179 = vunpack.c.l.b16 %v43
    %v180 = vunpack.c.l.b16 %v44
    %v181 = vunpack.c.l.b16 %v45
    %v182 = vunpack.c.l.b16 %v46
    %v183 = vunpack.c.l.b16 %v47
    %v184 = vunpack.c.l.b16 %v48
    %v185 = vunpack.c.l.b16 %v49
    %v186 = vunpack.c.l.b16 %v50
    %v187 = vunpack.c.l.b16 %v51
    %v188 = vunpack.c.l.b16 %v52
    %v189 = vunpack.c.l.b16 %v53
    %v190 = vunpack.c.l.b16 %v54
    %v191 = vunpack.c.l.b16 %v55
    %v192 = vunpack.c.l.b16 %v56
    %v193 = vunpack.c.l.b16 %v57
    %v194 = vunpack.c.l.b16 %v58
    %v195 = vunpack.c.l.b16 %v59
    %v196 = vunpack.c.l.b16 %v60
    %v197 = vunpack.c.l.b16 %v61
    %v198 = vunpack.c.l.b16 %v62
    %v199 = vunpack.c.l.b16 %v63
    %v200 = vunpack.c.l.b16 %v64
    %v201 = vunpack.c.l.b16 %v65
    %v202 = vunpack.c.l.b16 %v66
    %v203 = vunpack.c.l.b16 %v67
    %v204 = vunpack.c.l.b16 %v68
    %v205 = vunpack.c.l.b16 %v69
    %v206 = vunpack.c.l.b16 %v70
    %v207 = vunpack.c.l.b16 %v71
    %v208 = vunpack.c.l.b16 %v72
    %v209 = vunpack.c.l.b16 %v73
    %v210 = vunpack.c.l.b16 %v74
    %v211 = vunpack.c.l.b16 %v75
    %v212 = vunpack.c.l.b16 %v76
    %v213 = vunpack.c.l.b16 %v77
    %v214 = vunpack.c.l.b16 %v78
    %v215 = vunpack.c.l.b16 %v79
    %v216 = vunpack.c.l.b16 %v80
    %v217 = vunpack.c.l.b16 %v81
    %v218 = vunpack.c.l.b16 %v82
    %v219 = vunpack.c.l.b16 %v83
    %v220 = vunpack.c.l.b16 %v84
    %v221 = vunpack.c.l.b16 %v85
    %v222 = vpack.c.b16 %v159, %v158
    %v223 = vpack.c.b16 %v161, %v160
    %v224 = vpack.c.b16 %v163, %v162
    %v225 = vpack.c.b16 %v165, %v164
    %v226 = vpack.c.b16 %v167, %v166
    %v227 = vpack.c.b16 %v169, %v168
    %v228 = vpack.c.b16 %v171, %v170
    %v229 = vpack.c.b16 %v173, %v172
    %v230 = vpack.c.b16 %v175, %v174
    %v231 = vpack.c.b16 %v177, %v176
    %v232 = vpack.c.b16 %v179, %v178
    %v233 = vpack.c.b16 %v181, %v180
    %v234 = vpack.c.b16 %v183, %v182
    %v235 = vpack.c.b16 %v185, %v184
    %v236 = vpack.c.b16 %v187, %v186
    %v237 = vpack.c.b16 %v189, %v188
    %v238 = vpack.c.b16 %v191, %v190
    %v239 = vpack.c.b16 %v193, %v192
    %v240 = vpack.c.b16 %v195, %v194
    %v241 = vpack.c.b16 %v197, %v196
    %v242 = vpack.c.b16 %v199, %v198
    %v243 = vpack.c.b16 %v201, %v200
    %v244 = vpack.c.b16 %v203, %v202
    %v245 = vpack.c.b16 %v205, %v204
    %v246 = vpack.c.b16 %v207, %v206
    %v247 = vpack.c.b16 %v209, %v208
    %v248 = vpack.c.b16 %v211, %v210
    %v249 = vpack.c.b16 %v213, %v212
    %v250 = vpack.c.b16 %v215, %v214
    %v251 = vpack.c.b16 %v217, %v216
    %v252 = vpack.c.b16 %v219, %v218
    %v253 = vpack.c.b16 %v221, %v220
    %vm254 = vcmask 64512
    %v256 = vsel %vm254, %v222, 0
    %v259 = vsel %vm254, %v223, 0
    %v262 = vsel %vm254, %v224, 0
    %v265 = vsel %vm254, %v225, 0
    %v268 = vsel %vm254, %v226, 0
    %v271 = vsel %vm254, %v227, 0
    %v274 = vsel %vm254, %v228, 0
    %v277 = vsel %vm254, %v229, 0
    %v280 = vsel %vm254, %v230, 0
    %v283 = vsel %vm254, %v231, 0
    %v286 = vsel %vm254, %v232, 0
    %v289 = vsel %vm254, %v233, 0
    %v292 = vsel %vm254, %v234, 0
    %v295 = vsel %vm254, %v235, 0
    %v298 = vsel %vm254, %v236, 0
    %v301 = vsel %vm254, %v237, 0
    %v304 = vsel %vm254, %v238, 0
    %v307 = vsel %vm254, %v239, 0
    %v310 = vsel %vm254, %v240, 0
    %v313 = vsel %vm254, %v241, 0
    %v316 = vsel %vm254, %v242, 0
    %v319 = vsel %vm254, %v243, 0
    %v322 = vsel %vm254, %v244, 0
    %v325 = vsel %vm254, %v245, 0
    %v328 = vsel %vm254, %v246, 0
    %v331 = vsel %vm254, %v247, 0
    %v334 = vsel %vm254, %v248, 0
    %v337 = vsel %vm254, %v249, 0
    %v340 = vsel %vm254, %v250, 0
    %v343 = vsel %vm254, %v251, 0
    %v346 = vsel %vm254, %v252, 0
    %v349 = vsel %vm254, %v253, 0
    %vm351 = vcmask 1043456
    %v353 = vsel %vm351, %v86, 0
    %355 = vmatprep.subr.bf16.mxu0 0
    %356 = vmatpush1.bf16.msra.mxu0 0
    %357 = vmatprep.subr.bf16.mxu0 0
    %358 = vmatpush1.bf16.msra.mxu0 0
    %359 = vmatprep.subr.bf16.mxu0 0
    %360 = vmatpush1.bf16.msra.mxu0 0
    %361 = vmatprep.subr.bf16.mxu0 0
    %362 = vmatpush1.bf16.msra.mxu0 0
    %363 = vmatprep.subr.bf16.mxu0 0
    %364 = vmatpush1.bf16.msra.mxu0 0
    %365 = vmatprep.subr.bf16.mxu0 0
    %366 = vmatpush1.bf16.msra.mxu0 0
    %367 = vmatprep.subr.bf16.mxu0 0
    %368 = vmatpush1.bf16.msra.mxu0 0
    %369 = vmatprep.subr.bf16.mxu0 0
    %370 = vmatpush1.bf16.msra.mxu0 %v353
    %371 = vmatprep.subr.bf16.mxu0 0
    %372 = vmatpush2.bf16.msra.mxu0 0
    %373 = vmatprep.subr.bf16.mxu0 0
    %374 = vmatpush2.bf16.msra.mxu0 0
    %375 = vmatprep.subr.bf16.mxu0 0
    %376 = vmatpush2.bf16.msra.mxu0 0
    %377 = vmatprep.subr.bf16.mxu0 0
    %378 = vmatpush2.bf16.msra.mxu0 0
    %379 = vmatprep.subr.bf16.mxu0 0
    %380 = vmatpush2.bf16.msra.mxu0 0
    %381 = vmatprep.subr.bf16.mxu0 0
    %382 = vmatpush2.bf16.msra.mxu0 0
    %383 = vmatprep.subr.bf16.mxu0 0
    %384 = vmatpush2.bf16.msra.mxu0 0
    %385 = vmatprep.subr.bf16.mxu0 0
    %386 = vmatpush2.bf16.msra.mxu0 0
    %387 = vmatprep.mubr.bf16.mxu0 0
    %388 = vmatmul.mubr.bf16.gmra.mxu0 %v256
    %v389 = vpop.f32.mrf.mxu0
    %v390 = vadd.f32 %v92, %v389
    %v391 = vpop.f32.mrf.mxu0
    %v392 = vpop.f32.mrf.mxu0
    %v393 = vadd.f32 %v92, %v392
    %v394 = vpop.f32.mrf.mxu0
    %395 = vmatprep.mubr.bf16.mxu0 0
    %396 = vmatmul.mubr.bf16.gmra.mxu0 %v259
    %v397 = vpop.f32.mrf.mxu0
    %v398 = vadd.f32 %v92, %v397
    %v399 = vpop.f32.mrf.mxu0
    %v400 = vpop.f32.mrf.mxu0
    %v401 = vadd.f32 %v92, %v400
    %v402 = vpop.f32.mrf.mxu0
    %403 = vmatprep.mubr.bf16.mxu0 0
    %404 = vmatmul.mubr.bf16.gmra.mxu0 %v262
    %v405 = vpop.f32.mrf.mxu0
    %v406 = vadd.f32 %v92, %v405
    %v407 = vpop.f32.mrf.mxu0
    %v408 = vpop.f32.mrf.mxu0
    %v409 = vadd.f32 %v92, %v408
    %v410 = vpop.f32.mrf.mxu0
    %411 = vmatprep.mubr.bf16.mxu0 0
    %412 = vmatmul.mubr.bf16.gmra.mxu0 %v265
    %v413 = vpop.f32.mrf.mxu0
    %v414 = vadd.f32 %v92, %v413
    %v415 = vpop.f32.mrf.mxu0
    %v416 = vpop.f32.mrf.mxu0
    %v417 = vadd.f32 %v92, %v416
    %v418 = vpop.f32.mrf.mxu0
    %419 = vmatprep.mubr.bf16.mxu0 0
    %420 = vmatmul.mubr.bf16.gmra.mxu0 %v268
    %v421 = vpop.f32.mrf.mxu0
    %v422 = vadd.f32 %v92, %v421
    %v423 = vpop.f32.mrf.mxu0
    %v424 = vpop.f32.mrf.mxu0
    %v425 = vadd.f32 %v92, %v424
    %v426 = vpop.f32.mrf.mxu0
    %427 = vmatprep.mubr.bf16.mxu0 0
    %428 = vmatmul.mubr.bf16.gmra.mxu0 %v271
    %v429 = vpop.f32.mrf.mxu0
    %v430 = vadd.f32 %v92, %v429
    %v431 = vpop.f32.mrf.mxu0
    %v432 = vpop.f32.mrf.mxu0
    %v433 = vadd.f32 %v92, %v432
    %v434 = vpop.f32.mrf.mxu0
    %435 = vmatprep.mubr.bf16.mxu0 0
    %436 = vmatmul.mubr.bf16.gmra.mxu0 %v274
    %v437 = vpop.f32.mrf.mxu0
    %v438 = vadd.f32 %v92, %v437
    %v439 = vpop.f32.mrf.mxu0
    %v440 = vpop.f32.mrf.mxu0
    %v441 = vadd.f32 %v92, %v440
    %v442 = vpop.f32.mrf.mxu0
    %443 = vmatprep.mubr.bf16.mxu0 0
    %444 = vmatmul.mubr.bf16.gmra.mxu0 %v277
    %v445 = vpop.f32.mrf.mxu0
    %v446 = vadd.f32 %v92, %v445
    %v447 = vpop.f32.mrf.mxu0
    %v448 = vpop.f32.mrf.mxu0
    %v449 = vadd.f32 %v92, %v448
    %v450 = vpop.f32.mrf.mxu0
    %451 = vmatprep.mubr.bf16.mxu0 0
    %452 = vmatmul.mubr.bf16.gmra.mxu0 %v280
    %v453 = vpop.f32.mrf.mxu0
    %v454 = vadd.f32 %v92, %v453
    %v455 = vpop.f32.mrf.mxu0
    %v456 = vpop.f32.mrf.mxu0
    %v457 = vadd.f32 %v92, %v456
    %v458 = vpop.f32.mrf.mxu0
    %459 = vmatprep.mubr.bf16.mxu0 0
    %460 = vmatmul.mubr.bf16.gmra.mxu0 %v283
    %v461 = vpop.f32.mrf.mxu0
    %v462 = vadd.f32 %v92, %v461
    %v463 = vpop.f32.mrf.mxu0
    %v464 = vpop.f32.mrf.mxu0
    %v465 = vadd.f32 %v92, %v464
    %v466 = vpop.f32.mrf.mxu0
    %467 = vmatprep.mubr.bf16.mxu0 0
    %468 = vmatmul.mubr.bf16.gmra.mxu0 %v286
    %v469 = vpop.f32.mrf.mxu0
    %v470 = vadd.f32 %v92, %v469
    %v471 = vpop.f32.mrf.mxu0
    %v472 = vpop.f32.mrf.mxu0
    %v473 = vadd.f32 %v92, %v472
    %v474 = vpop.f32.mrf.mxu0
    %475 = vmatprep.mubr.bf16.mxu0 0
    %476 = vmatmul.mubr.bf16.gmra.mxu0 %v289
    %v477 = vpop.f32.mrf.mxu0
    %v478 = vadd.f32 %v92, %v477
    %v479 = vpop.f32.mrf.mxu0
    %v480 = vpop.f32.mrf.mxu0
    %v481 = vadd.f32 %v92, %v480
    %v482 = vpop.f32.mrf.mxu0
    %483 = vmatprep.mubr.bf16.mxu0 0
    %484 = vmatmul.mubr.bf16.gmra.mxu0 %v292
    %v485 = vpop.f32.mrf.mxu0
    %v486 = vadd.f32 %v92, %v485
    %v487 = vpop.f32.mrf.mxu0
    %v488 = vpop.f32.mrf.mxu0
    %v489 = vadd.f32 %v92, %v488
    %v490 = vpop.f32.mrf.mxu0
    %491 = vmatprep.mubr.bf16.mxu0 0
    %492 = vmatmul.mubr.bf16.gmra.mxu0 %v295
    %v493 = vpop.f32.mrf.mxu0
    %v494 = vadd.f32 %v92, %v493
    %v495 = vpop.f32.mrf.mxu0
    %v496 = vpop.f32.mrf.mxu0
    %v497 = vadd.f32 %v92, %v496
    %v498 = vpop.f32.mrf.mxu0
    %499 = vmatprep.mubr.bf16.mxu0 0
    %500 = vmatmul.mubr.bf16.gmra.mxu0 %v298
    %v501 = vpop.f32.mrf.mxu0
    %v502 = vadd.f32 %v92, %v501
    %v503 = vpop.f32.mrf.mxu0
    %v504 = vpop.f32.mrf.mxu0
    %v505 = vadd.f32 %v92, %v504
    %v506 = vpop.f32.mrf.mxu0
    %507 = vmatprep.mubr.bf16.mxu0 0
    %508 = vmatmul.mubr.bf16.gmra.mxu0 %v301
    %v509 = vpop.f32.mrf.mxu0
    %v510 = vadd.f32 %v92, %v509
    %v511 = vpop.f32.mrf.mxu0
    %v512 = vpop.f32.mrf.mxu0
    %v513 = vadd.f32 %v92, %v512
    %v514 = vpop.f32.mrf.mxu0
    %515 = vmatprep.mubr.bf16.mxu0 0
    %516 = vmatmul.mubr.bf16.gmra.mxu0 %v304
    %v517 = vpop.f32.mrf.mxu0
    %v518 = vadd.f32 %v92, %v517
    %v519 = vpop.f32.mrf.mxu0
    %v520 = vpop.f32.mrf.mxu0
    %v521 = vadd.f32 %v92, %v520
    %v522 = vpop.f32.mrf.mxu0
    %523 = vmatprep.mubr.bf16.mxu0 0
    %524 = vmatmul.mubr.bf16.gmra.mxu0 %v307
    %v525 = vpop.f32.mrf.mxu0
    %v526 = vadd.f32 %v92, %v525
    %v527 = vpop.f32.mrf.mxu0
    %v528 = vpop.f32.mrf.mxu0
    %v529 = vadd.f32 %v92, %v528
    %v530 = vpop.f32.mrf.mxu0
    %531 = vmatprep.mubr.bf16.mxu0 0
    %532 = vmatmul.mubr.bf16.gmra.mxu0 %v310
    %v533 = vpop.f32.mrf.mxu0
    %v534 = vadd.f32 %v92, %v533
    %v535 = vpop.f32.mrf.mxu0
    %v536 = vpop.f32.mrf.mxu0
    %v537 = vadd.f32 %v92, %v536
    %v538 = vpop.f32.mrf.mxu0
    %539 = vmatprep.mubr.bf16.mxu0 0
    %540 = vmatmul.mubr.bf16.gmra.mxu0 %v313
    %v541 = vpop.f32.mrf.mxu0
    %v542 = vadd.f32 %v92, %v541
    %v543 = vpop.f32.mrf.mxu0
    %v544 = vpop.f32.mrf.mxu0
    %v545 = vadd.f32 %v92, %v544
    %v546 = vpop.f32.mrf.mxu0
    %547 = vmatprep.mubr.bf16.mxu0 0
    %548 = vmatmul.mubr.bf16.gmra.mxu0 %v316
    %v549 = vpop.f32.mrf.mxu0
    %v550 = vadd.f32 %v92, %v549
    %v551 = vpop.f32.mrf.mxu0
    %v552 = vpop.f32.mrf.mxu0
    %v553 = vadd.f32 %v92, %v552
    %v554 = vpop.f32.mrf.mxu0
    %555 = vmatprep.mubr.bf16.mxu0 0
    %556 = vmatmul.mubr.bf16.gmra.mxu0 %v319
    %v557 = vpop.f32.mrf.mxu0
    %v558 = vadd.f32 %v92, %v557
    %v559 = vpop.f32.mrf.mxu0
    %v560 = vpop.f32.mrf.mxu0
    %v561 = vadd.f32 %v92, %v560
    %v562 = vpop.f32.mrf.mxu0
    %563 = vmatprep.mubr.bf16.mxu0 0
    %564 = vmatmul.mubr.bf16.gmra.mxu0 %v322
    %v565 = vpop.f32.mrf.mxu0
    %v566 = vadd.f32 %v92, %v565
    %v567 = vpop.f32.mrf.mxu0
    %v568 = vpop.f32.mrf.mxu0
    %v569 = vadd.f32 %v92, %v568
    %v570 = vpop.f32.mrf.mxu0
    %571 = vmatprep.mubr.bf16.mxu0 0
    %572 = vmatmul.mubr.bf16.gmra.mxu0 %v325
    %v573 = vpop.f32.mrf.mxu0
    %v574 = vadd.f32 %v92, %v573
    %v575 = vpop.f32.mrf.mxu0
    %v576 = vpop.f32.mrf.mxu0
    %v577 = vadd.f32 %v92, %v576
    %v578 = vpop.f32.mrf.mxu0
    %579 = vmatprep.mubr.bf16.mxu0 0
    %580 = vmatmul.mubr.bf16.gmra.mxu0 %v328
    %v581 = vpop.f32.mrf.mxu0
    %v582 = vadd.f32 %v92, %v581
    %v583 = vpop.f32.mrf.mxu0
    %v584 = vpop.f32.mrf.mxu0
    %v585 = vadd.f32 %v92, %v584
    %v586 = vpop.f32.mrf.mxu0
    %587 = vmatprep.mubr.bf16.mxu0 0
    %588 = vmatmul.mubr.bf16.gmra.mxu0 %v331
    %v589 = vpop.f32.mrf.mxu0
    %v590 = vadd.f32 %v92, %v589
    %v591 = vpop.f32.mrf.mxu0
    %v592 = vpop.f32.mrf.mxu0
    %v593 = vadd.f32 %v92, %v592
    %v594 = vpop.f32.mrf.mxu0
    %595 = vmatprep.mubr.bf16.mxu0 0
    %596 = vmatmul.mubr.bf16.gmra.mxu0 %v334
    %v597 = vpop.f32.mrf.mxu0
    %v598 = vadd.f32 %v92, %v597
    %v599 = vpop.f32.mrf.mxu0
    %v600 = vpop.f32.mrf.mxu0
    %v601 = vadd.f32 %v92, %v600
    %v602 = vpop.f32.mrf.mxu0
    %603 = vmatprep.mubr.bf16.mxu0 0
    %604 = vmatmul.mubr.bf16.gmra.mxu0 %v337
    %v605 = vpop.f32.mrf.mxu0
    %v606 = vadd.f32 %v92, %v605
    %v607 = vpop.f32.mrf.mxu0
    %v608 = vpop.f32.mrf.mxu0
    %v609 = vadd.f32 %v92, %v608
    %v610 = vpop.f32.mrf.mxu0
    %611 = vmatprep.mubr.bf16.mxu0 0
    %612 = vmatmul.mubr.bf16.gmra.mxu0 %v340
    %v613 = vpop.f32.mrf.mxu0
    %v614 = vadd.f32 %v92, %v613
    %v615 = vpop.f32.mrf.mxu0
    %v616 = vpop.f32.mrf.mxu0
    %v617 = vadd.f32 %v92, %v616
    %v618 = vpop.f32.mrf.mxu0
    %619 = vmatprep.mubr.bf16.mxu0 0
    %620 = vmatmul.mubr.bf16.gmra.mxu0 %v343
    %v621 = vpop.f32.mrf.mxu0
    %v622 = vadd.f32 %v92, %v621
    %v623 = vpop.f32.mrf.mxu0
    %v624 = vpop.f32.mrf.mxu0
    %v625 = vadd.f32 %v92, %v624
    %v626 = vpop.f32.mrf.mxu0
    %627 = vmatprep.mubr.bf16.mxu0 0
    %628 = vmatmul.mubr.bf16.gmra.mxu0 %v346
    %v629 = vpop.f32.mrf.mxu0
    %v630 = vadd.f32 %v92, %v629
    %v631 = vpop.f32.mrf.mxu0
    %v632 = vpop.f32.mrf.mxu0
    %v633 = vadd.f32 %v92, %v632
    %v634 = vpop.f32.mrf.mxu0
    %635 = vmatprep.mubr.bf16.mxu0 0
    %636 = vmatmul.mubr.bf16.gmra.mxu0 %v349
    %v637 = vpop.f32.mrf.mxu0
    %v638 = vadd.f32 %v92, %v637
    %v639 = vpop.f32.mrf.mxu0
    %v640 = vpop.f32.mrf.mxu0
    %v641 = vadd.f32 %v92, %v640
    %v642 = vpop.f32.mrf.mxu0
    %643 = vdwg.mxu0
    %v644 = vmax.f32 %v390, 0.0
    %v645 = vmax.f32 %v393, 0.0
    %v646 = vmax.f32 %v398, 0.0
    %v647 = vmax.f32 %v401, 0.0
    %v648 = vmax.f32 %v406, 0.0
    %v649 = vmax.f32 %v409, 0.0
    %v650 = vmax.f32 %v414, 0.0
    %v651 = vmax.f32 %v417, 0.0
    %v652 = vmax.f32 %v422, 0.0
    %v653 = vmax.f32 %v425, 0.0
    %v654 = vmax.f32 %v430, 0.0
    %v655 = vmax.f32 %v433, 0.0
    %v656 = vmax.f32 %v438, 0.0
    %v657 = vmax.f32 %v441, 0.0
    %v658 = vmax.f32 %v446, 0.0
    %v659 = vmax.f32 %v449, 0.0
    %v660 = vmax.f32 %v454, 0.0
    %v661 = vmax.f32 %v457, 0.0
    %v662 = vmax.f32 %v462, 0.0
    %v663 = vmax.f32 %v465, 0.0
    %v664 = vmax.f32 %v470, 0.0
    %v665 = vmax.f32 %v473, 0.0
    %v666 = vmax.f32 %v478, 0.0
    %v667 = vmax.f32 %v481, 0.0
    %v668 = vmax.f32 %v486, 0.0
    %v669 = vmax.f32 %v489, 0.0
    %v670 = vmax.f32 %v494, 0.0
    %v671 = vmax.f32 %v497, 0.0
    %v672 = vmax.f32 %v502, 0.0
    %v673 = vmax.f32 %v505, 0.0
    %v674 = vmax.f32 %v510, 0.0
    %v675 = vmax.f32 %v513, 0.0
    %v676 = vmax.f32 %v518, 0.0
    %v677 = vmax.f32 %v521, 0.0
    %v678 = vmax.f32 %v526, 0.0
    %v679 = vmax.f32 %v529, 0.0
    %v680 = vmax.f32 %v534, 0.0
    %v681 = vmax.f32 %v537, 0.0
    %v682 = vmax.f32 %v542, 0.0
    %v683 = vmax.f32 %v545, 0.0
    %v684 = vmax.f32 %v550, 0.0
    %v685 = vmax.f32 %v553, 0.0
    %v686 = vmax.f32 %v558, 0.0
    %v687 = vmax.f32 %v561, 0.0
    %v688 = vmax.f32 %v566, 0.0
    %v689 = vmax.f32 %v569, 0.0
    %v690 = vmax.f32 %v574, 0.0
    %v691 = vmax.f32 %v577, 0.0
    %v692 = vmax.f32 %v582, 0.0
    %v693 = vmax.f32 %v585, 0.0
    %v694 = vmax.f32 %v590, 0.0
    %v695 = vmax.f32 %v593, 0.0
    %v696 = vmax.f32 %v598, 0.0
    %v697 = vmax.f32 %v601, 0.0
    %v698 = vmax.f32 %v606, 0.0
    %v699 = vmax.f32 %v609, 0.0
    %v700 = vmax.f32 %v614, 0.0
    %v701 = vmax.f32 %v617, 0.0
    %v702 = vmax.f32 %v622, 0.0
    %v703 = vmax.f32 %v625, 0.0
    %v704 = vmax.f32 %v630, 0.0
    %v705 = vmax.f32 %v633, 0.0
    %v706 = vmax.f32 %v638, 0.0
    %v707 = vmax.f32 %v641, 0.0
    %v708 = vpack.c.bf16 %v645, %v644
    %v709 = vpack.c.bf16 %v647, %v646
    %v710 = vpack.c.bf16 %v649, %v648
    %v711 = vpack.c.bf16 %v651, %v650
    %v712 = vpack.c.bf16 %v653, %v652
    %v713 = vpack.c.bf16 %v655, %v654
    %v714 = vpack.c.bf16 %v657, %v656
    %v715 = vpack.c.bf16 %v659, %v658
    %v716 = vpack.c.bf16 %v661, %v660
    %v717 = vpack.c.bf16 %v663, %v662
    %v718 = vpack.c.bf16 %v665, %v664
    %v719 = vpack.c.bf16 %v667, %v666
    %v720 = vpack.c.bf16 %v669, %v668
    %v721 = vpack.c.bf16 %v671, %v670
    %v722 = vpack.c.bf16 %v673, %v672
    %v723 = vpack.c.bf16 %v675, %v674
    %v724 = vpack.c.bf16 %v677, %v676
    %v725 = vpack.c.bf16 %v679, %v678
    %v726 = vpack.c.bf16 %v681, %v680
    %v727 = vpack.c.bf16 %v683, %v682
    %v728 = vpack.c.bf16 %v685, %v684
    %v729 = vpack.c.bf16 %v687, %v686
    %v730 = vpack.c.bf16 %v689, %v688
    %v731 = vpack.c.bf16 %v691, %v690
    %v732 = vpack.c.bf16 %v693, %v692
    %v733 = vpack.c.bf16 %v695, %v694
    %v734 = vpack.c.bf16 %v697, %v696
    %v735 = vpack.c.bf16 %v699, %v698
    %v736 = vpack.c.bf16 %v701, %v700
    %v737 = vpack.c.bf16 %v703, %v702
    %v738 = vpack.c.bf16 %v705, %v704
    %v739 = vpack.c.bf16 %v707, %v706
    %v740 = vld [vmem:[%s3] sm:$0xf]
    %v741 = vld [vmem:[%s4] sm:$0x1]
    %v743 = vlaneseq
    %v744 = vshrl.u32 %v743, 7
    %v745 = vsub.s32 0, %v744
    %v746 = vrot.slane %v741, %v745
    %v749 = vsel %vm254, %v708, 0
    %v752 = vsel %vm254, %v709, 0
    %v755 = vsel %vm254, %v710, 0
    %v758 = vsel %vm254, %v711, 0
    %v761 = vsel %vm254, %v712, 0
    %v764 = vsel %vm254, %v713, 0
    %v767 = vsel %vm254, %v714, 0
    %v770 = vsel %vm254, %v715, 0
    %v773 = vsel %vm254, %v716, 0
    %v776 = vsel %vm254, %v717, 0
    %v779 = vsel %vm254, %v718, 0
    %v782 = vsel %vm254, %v719, 0
    %v785 = vsel %vm254, %v720, 0
    %v788 = vsel %vm254, %v721, 0
    %v791 = vsel %vm254, %v722, 0
    %v794 = vsel %vm254, %v723, 0
    %v797 = vsel %vm254, %v724, 0
    %v800 = vsel %vm254, %v725, 0
    %v803 = vsel %vm254, %v726, 0
    %v806 = vsel %vm254, %v727, 0
    %v809 = vsel %vm254, %v728, 0
    %v812 = vsel %vm254, %v729, 0
    %v815 = vsel %vm254, %v730, 0
    %v818 = vsel %vm254, %v731, 0
    %v821 = vsel %vm254, %v732, 0
    %v824 = vsel %vm254, %v733, 0
    %v827 = vsel %vm254, %v734, 0
    %v830 = vsel %vm254, %v735, 0
    %v833 = vsel %vm254, %v736, 0
    %v836 = vsel %vm254, %v737, 0
    %v839 = vsel %vm254, %v738, 0
    %v842 = vsel %vm254, %v739, 0
    %v845 = vsel %vm351, %v740, 0
    %847 = vmatprep.subr.bf16.mxu0 0
    %848 = vmatpush1.bf16.msra.mxu0 0
    %849 = vmatprep.subr.bf16.mxu0 0
    %850 = vmatpush1.bf16.msra.mxu0 0
    %851 = vmatprep.subr.bf16.mxu0 0
    %852 = vmatpush1.bf16.msra.mxu0 0
    %853 = vmatprep.subr.bf16.mxu0 0
    %854 = vmatpush1.bf16.msra.mxu0 0
    %855 = vmatprep.subr.bf16.mxu0 0
    %856 = vmatpush1.bf16.msra.mxu0 0
    %857 = vmatprep.subr.bf16.mxu0 0
    %858 = vmatpush1.bf16.msra.mxu0 0
    %859 = vmatprep.subr.bf16.mxu0 0
    %860 = vmatpush1.bf16.msra.mxu0 0
    %861 = vmatprep.subr.bf16.mxu0 0
    %862 = vmatpush1.bf16.msra.mxu0 %v845
    %863 = vmatprep.subr.bf16.mxu0 0
    %864 = vmatpush2.bf16.msra.mxu0 0
    %865 = vmatprep.subr.bf16.mxu0 0
    %866 = vmatpush2.bf16.msra.mxu0 0
    %867 = vmatprep.subr.bf16.mxu0 0
    %868 = vmatpush2.bf16.msra.mxu0 0
    %869 = vmatprep.subr.bf16.mxu0 0
    %870 = vmatpush2.bf16.msra.mxu0 0
    %871 = vmatprep.subr.bf16.mxu0 0
    %872 = vmatpush2.bf16.msra.mxu0 0
    %873 = vmatprep.subr.bf16.mxu0 0
    %874 = vmatpush2.bf16.msra.mxu0 0
    %875 = vmatprep.subr.bf16.mxu0 0
    %876 = vmatpush2.bf16.msra.mxu0 0
    %877 = vmatprep.subr.bf16.mxu0 0
    %878 = vmatpush2.bf16.msra.mxu0 0
    %879 = vmatprep.mubr.bf16.mxu0 0
    %880 = vmatmul.mubr.bf16.gmra.mxu0 %v749
    %v881 = vpop.f32.mrf.mxu0
    %v882 = vadd.f32 %v746, %v881
    %v883 = vpop.f32.mrf.mxu0
    %v884 = vpop.f32.mrf.mxu0
    %v885 = vadd.f32 %v746, %v884
    %v886 = vpop.f32.mrf.mxu0
    %887 = vmatprep.mubr.bf16.mxu0 0
    %888 = vmatmul.mubr.bf16.gmra.mxu0 %v752
    %v889 = vpop.f32.mrf.mxu0
    %v890 = vadd.f32 %v746, %v889
    %v891 = vpop.f32.mrf.mxu0
    %v892 = vpop.f32.mrf.mxu0
    %v893 = vadd.f32 %v746, %v892
    %v894 = vpop.f32.mrf.mxu0
    %895 = vmatprep.mubr.bf16.mxu0 0
    %896 = vmatmul.mubr.bf16.gmra.mxu0 %v755
    %v897 = vpop.f32.mrf.mxu0
    %v898 = vadd.f32 %v746, %v897
    %v899 = vpop.f32.mrf.mxu0
    %v900 = vpop.f32.mrf.mxu0
    %v901 = vadd.f32 %v746, %v900
    %v902 = vpop.f32.mrf.mxu0
    %903 = vmatprep.mubr.bf16.mxu0 0
    %904 = vmatmul.mubr.bf16.gmra.mxu0 %v758
    %v905 = vpop.f32.mrf.mxu0
    %v906 = vadd.f32 %v746, %v905
    %v907 = vpop.f32.mrf.mxu0
    %v908 = vpop.f32.mrf.mxu0
    %v909 = vadd.f32 %v746, %v908
    %v910 = vpop.f32.mrf.mxu0
    %911 = vmatprep.mubr.bf16.mxu0 0
    %912 = vmatmul.mubr.bf16.gmra.mxu0 %v761
    %v913 = vpop.f32.mrf.mxu0
    %v914 = vadd.f32 %v746, %v913
    %v915 = vpop.f32.mrf.mxu0
    %v916 = vpop.f32.mrf.mxu0
    %v917 = vadd.f32 %v746, %v916
    %v918 = vpop.f32.mrf.mxu0
    %919 = vmatprep.mubr.bf16.mxu0 0
    %920 = vmatmul.mubr.bf16.gmra.mxu0 %v764
    %v921 = vpop.f32.mrf.mxu0
    %v922 = vadd.f32 %v746, %v921
    %v923 = vpop.f32.mrf.mxu0
    %v924 = vpop.f32.mrf.mxu0
    %v925 = vadd.f32 %v746, %v924
    %v926 = vpop.f32.mrf.mxu0
    %927 = vmatprep.mubr.bf16.mxu0 0
    %928 = vmatmul.mubr.bf16.gmra.mxu0 %v767
    %v929 = vpop.f32.mrf.mxu0
    %v930 = vadd.f32 %v746, %v929
    %v931 = vpop.f32.mrf.mxu0
    %v932 = vpop.f32.mrf.mxu0
    %v933 = vadd.f32 %v746, %v932
    %v934 = vpop.f32.mrf.mxu0
    %935 = vmatprep.mubr.bf16.mxu0 0
    %936 = vmatmul.mubr.bf16.gmra.mxu0 %v770
    %v937 = vpop.f32.mrf.mxu0
    %v938 = vadd.f32 %v746, %v937
    %v939 = vpop.f32.mrf.mxu0
    %v940 = vpop.f32.mrf.mxu0
    %v941 = vadd.f32 %v746, %v940
    %v942 = vpop.f32.mrf.mxu0
    %943 = vmatprep.mubr.bf16.mxu0 0
    %944 = vmatmul.mubr.bf16.gmra.mxu0 %v773
    %v945 = vpop.f32.mrf.mxu0
    %v946 = vadd.f32 %v746, %v945
    %v947 = vpop.f32.mrf.mxu0
    %v948 = vpop.f32.mrf.mxu0
    %v949 = vadd.f32 %v746, %v948
    %v950 = vpop.f32.mrf.mxu0
    %951 = vmatprep.mubr.bf16.mxu0 0
    %952 = vmatmul.mubr.bf16.gmra.mxu0 %v776
    %v953 = vpop.f32.mrf.mxu0
    %v954 = vadd.f32 %v746, %v953
    %v955 = vpop.f32.mrf.mxu0
    %v956 = vpop.f32.mrf.mxu0
    %v957 = vadd.f32 %v746, %v956
    %v958 = vpop.f32.mrf.mxu0
    %959 = vmatprep.mubr.bf16.mxu0 0
    %960 = vmatmul.mubr.bf16.gmra.mxu0 %v779
    %v961 = vpop.f32.mrf.mxu0
    %v962 = vadd.f32 %v746, %v961
    %v963 = vpop.f32.mrf.mxu0
    %v964 = vpop.f32.mrf.mxu0
    %v965 = vadd.f32 %v746, %v964
    %v966 = vpop.f32.mrf.mxu0
    %967 = vmatprep.mubr.bf16.mxu0 0
    %968 = vmatmul.mubr.bf16.gmra.mxu0 %v782
    %v969 = vpop.f32.mrf.mxu0
    %v970 = vadd.f32 %v746, %v969
    %v971 = vpop.f32.mrf.mxu0
    %v972 = vpop.f32.mrf.mxu0
    %v973 = vadd.f32 %v746, %v972
    %v974 = vpop.f32.mrf.mxu0
    %975 = vmatprep.mubr.bf16.mxu0 0
    %976 = vmatmul.mubr.bf16.gmra.mxu0 %v785
    %v977 = vpop.f32.mrf.mxu0
    %v978 = vadd.f32 %v746, %v977
    %v979 = vpop.f32.mrf.mxu0
    %v980 = vpop.f32.mrf.mxu0
    %v981 = vadd.f32 %v746, %v980
    %v982 = vpop.f32.mrf.mxu0
    %983 = vmatprep.mubr.bf16.mxu0 0
    %984 = vmatmul.mubr.bf16.gmra.mxu0 %v788
    %v985 = vpop.f32.mrf.mxu0
    %v986 = vadd.f32 %v746, %v985
    %v987 = vpop.f32.mrf.mxu0
    %v988 = vpop.f32.mrf.mxu0
    %v989 = vadd.f32 %v746, %v988
    %v990 = vpop.f32.mrf.mxu0
    %991 = vmatprep.mubr.bf16.mxu0 0
    %992 = vmatmul.mubr.bf16.gmra.mxu0 %v791
    %v993 = vpop.f32.mrf.mxu0
    %v994 = vadd.f32 %v746, %v993
    %v995 = vpop.f32.mrf.mxu0
    %v996 = vpop.f32.mrf.mxu0
    %v997 = vadd.f32 %v746, %v996
    %v998 = vpop.f32.mrf.mxu0
    %999 = vmatprep.mubr.bf16.mxu0 0
    %1000 = vmatmul.mubr.bf16.gmra.mxu0 %v794
    %v1001 = vpop.f32.mrf.mxu0
    %v1002 = vadd.f32 %v746, %v1001
    %v1003 = vpop.f32.mrf.mxu0
    %v1004 = vpop.f32.mrf.mxu0
    %v1005 = vadd.f32 %v746, %v1004
    %v1006 = vpop.f32.mrf.mxu0
    %1007 = vmatprep.mubr.bf16.mxu0 0
    %1008 = vmatmul.mubr.bf16.gmra.mxu0 %v797
    %v1009 = vpop.f32.mrf.mxu0
    %v1010 = vadd.f32 %v746, %v1009
    %v1011 = vpop.f32.mrf.mxu0
    %v1012 = vpop.f32.mrf.mxu0
    %v1013 = vadd.f32 %v746, %v1012
    %v1014 = vpop.f32.mrf.mxu0
    %1015 = vmatprep.mubr.bf16.mxu0 0
    %1016 = vmatmul.mubr.bf16.gmra.mxu0 %v800
    %v1017 = vpop.f32.mrf.mxu0
    %v1018 = vadd.f32 %v746, %v1017
    %v1019 = vpop.f32.mrf.mxu0
    %v1020 = vpop.f32.mrf.mxu0
    %v1021 = vadd.f32 %v746, %v1020
    %v1022 = vpop.f32.mrf.mxu0
    %1023 = vmatprep.mubr.bf16.mxu0 0
    %1024 = vmatmul.mubr.bf16.gmra.mxu0 %v803
    %v1025 = vpop.f32.mrf.mxu0
    %v1026 = vadd.f32 %v746, %v1025
    %v1027 = vpop.f32.mrf.mxu0
    %v1028 = vpop.f32.mrf.mxu0
    %v1029 = vadd.f32 %v746, %v1028
    %v1030 = vpop.f32.mrf.mxu0
    %1031 = vmatprep.mubr.bf16.mxu0 0
    %1032 = vmatmul.mubr.bf16.gmra.mxu0 %v806
    %v1033 = vpop.f32.mrf.mxu0
    %v1034 = vadd.f32 %v746, %v1033
    %v1035 = vpop.f32.mrf.mxu0
    %v1036 = vpop.f32.mrf.mxu0
    %v1037 = vadd.f32 %v746, %v1036
    %v1038 = vpop.f32.mrf.mxu0
    %1039 = vmatprep.mubr.bf16.mxu0 0
    %1040 = vmatmul.mubr.bf16.gmra.mxu0 %v809
    %v1041 = vpop.f32.mrf.mxu0
    %v1042 = vadd.f32 %v746, %v1041
    %v1043 = vpop.f32.mrf.mxu0
    %v1044 = vpop.f32.mrf.mxu0
    %v1045 = vadd.f32 %v746, %v1044
    %v1046 = vpop.f32.mrf.mxu0
    %1047 = vmatprep.mubr.bf16.mxu0 0
    %1048 = vmatmul.mubr.bf16.gmra.mxu0 %v812
    %v1049 = vpop.f32.mrf.mxu0
    %v1050 = vadd.f32 %v746, %v1049
    %v1051 = vpop.f32.mrf.mxu0
    %v1052 = vpop.f32.mrf.mxu0
    %v1053 = vadd.f32 %v746, %v1052
    %v1054 = vpop.f32.mrf.mxu0
    %1055 = vmatprep.mubr.bf16.mxu0 0
    %1056 = vmatmul.mubr.bf16.gmra.mxu0 %v815
    %v1057 = vpop.f32.mrf.mxu0
    %v1058 = vadd.f32 %v746, %v1057
    %v1059 = vpop.f32.mrf.mxu0
    %v1060 = vpop.f32.mrf.mxu0
    %v1061 = vadd.f32 %v746, %v1060
    %v1062 = vpop.f32.mrf.mxu0
    %1063 = vmatprep.mubr.bf16.mxu0 0
    %1064 = vmatmul.mubr.bf16.gmra.mxu0 %v818
    %v1065 = vpop.f32.mrf.mxu0
    %v1066 = vadd.f32 %v746, %v1065
    %v1067 = vpop.f32.mrf.mxu0
    %v1068 = vpop.f32.mrf.mxu0
    %v1069 = vadd.f32 %v746, %v1068
    %v1070 = vpop.f32.mrf.mxu0
    %1071 = vmatprep.mubr.bf16.mxu0 0
    %1072 = vmatmul.mubr.bf16.gmra.mxu0 %v821
    %v1073 = vpop.f32.mrf.mxu0
    %v1074 = vadd.f32 %v746, %v1073
    %v1075 = vpop.f32.mrf.mxu0
    %v1076 = vpop.f32.mrf.mxu0
    %v1077 = vadd.f32 %v746, %v1076
    %v1078 = vpop.f32.mrf.mxu0
    %1079 = vmatprep.mubr.bf16.mxu0 0
    %1080 = vmatmul.mubr.bf16.gmra.mxu0 %v824
    %v1081 = vpop.f32.mrf.mxu0
    %v1082 = vadd.f32 %v746, %v1081
    %v1083 = vpop.f32.mrf.mxu0
    %v1084 = vpop.f32.mrf.mxu0
    %v1085 = vadd.f32 %v746, %v1084
    %v1086 = vpop.f32.mrf.mxu0
    %1087 = vmatprep.mubr.bf16.mxu0 0
    %1088 = vmatmul.mubr.bf16.gmra.mxu0 %v827
    %v1089 = vpop.f32.mrf.mxu0
    %v1090 = vadd.f32 %v746, %v1089
    %v1091 = vpop.f32.mrf.mxu0
    %v1092 = vpop.f32.mrf.mxu0
    %v1093 = vadd.f32 %v746, %v1092
    %v1094 = vpop.f32.mrf.mxu0
    %1095 = vmatprep.mubr.bf16.mxu0 0
    %1096 = vmatmul.mubr.bf16.gmra.mxu0 %v830
    %v1097 = vpop.f32.mrf.mxu0
    %v1098 = vadd.f32 %v746, %v1097
    %v1099 = vpop.f32.mrf.mxu0
    %v1100 = vpop.f32.mrf.mxu0
    %v1101 = vadd.f32 %v746, %v1100
    %v1102 = vpop.f32.mrf.mxu0
    %1103 = vmatprep.mubr.bf16.mxu0 0
    %1104 = vmatmul.mubr.bf16.gmra.mxu0 %v833
    %v1105 = vpop.f32.mrf.mxu0
    %v1106 = vadd.f32 %v746, %v1105
    %v1107 = vpop.f32.mrf.mxu0
    %v1108 = vpop.f32.mrf.mxu0
    %v1109 = vadd.f32 %v746, %v1108
    %v1110 = vpop.f32.mrf.mxu0
    %1111 = vmatprep.mubr.bf16.mxu0 0
    %1112 = vmatmul.mubr.bf16.gmra.mxu0 %v836
    %v1113 = vpop.f32.mrf.mxu0
    %v1114 = vadd.f32 %v746, %v1113
    %v1115 = vpop.f32.mrf.mxu0
    %v1116 = vpop.f32.mrf.mxu0
    %v1117 = vadd.f32 %v746, %v1116
    %v1118 = vpop.f32.mrf.mxu0
    %1119 = vmatprep.mubr.bf16.mxu0 0
    %1120 = vmatmul.mubr.bf16.gmra.mxu0 %v839
    %v1121 = vpop.f32.mrf.mxu0
    %v1122 = vadd.f32 %v746, %v1121
    %v1123 = vpop.f32.mrf.mxu0
    %v1124 = vpop.f32.mrf.mxu0
    %v1125 = vadd.f32 %v746, %v1124
    %v1126 = vpop.f32.mrf.mxu0
    %1127 = vmatprep.mubr.bf16.mxu0 0
    %1128 = vmatmul.mubr.bf16.gmra.mxu0 %v842
    %v1129 = vpop.f32.mrf.mxu0
    %v1130 = vadd.f32 %v746, %v1129
    %v1131 = vpop.f32.mrf.mxu0
    %v1132 = vpop.f32.mrf.mxu0
    %v1133 = vadd.f32 %v746, %v1132
    %v1134 = vpop.f32.mrf.mxu0
    %1135 = vdwg.mxu0
    %v1136 = vpack.c.bf16 %v885, %v882
    %v1137 = vpack.c.bf16 %v893, %v890
    %v1138 = vpack.c.bf16 %v901, %v898
    %v1139 = vpack.c.bf16 %v909, %v906
    %v1140 = vpack.c.bf16 %v917, %v914
    %v1141 = vpack.c.bf16 %v925, %v922
    %v1142 = vpack.c.bf16 %v933, %v930
    %v1143 = vpack.c.bf16 %v941, %v938
    %v1144 = vpack.c.bf16 %v949, %v946
    %v1145 = vpack.c.bf16 %v957, %v954
    %v1146 = vpack.c.bf16 %v965, %v962
    %v1147 = vpack.c.bf16 %v973, %v970
    %v1148 = vpack.c.bf16 %v981, %v978
    %v1149 = vpack.c.bf16 %v989, %v986
    %v1150 = vpack.c.bf16 %v997, %v994
    %v1151 = vpack.c.bf16 %v1005, %v1002
    %v1152 = vpack.c.bf16 %v1013, %v1010
    %v1153 = vpack.c.bf16 %v1021, %v1018
    %v1154 = vpack.c.bf16 %v1029, %v1026
    %v1155 = vpack.c.bf16 %v1037, %v1034
    %v1156 = vpack.c.bf16 %v1045, %v1042
    %v1157 = vpack.c.bf16 %v1053, %v1050
    %v1158 = vpack.c.bf16 %v1061, %v1058
    %v1159 = vpack.c.bf16 %v1069, %v1066
    %v1160 = vpack.c.bf16 %v1077, %v1074
    %v1161 = vpack.c.bf16 %v1085, %v1082
    %v1162 = vpack.c.bf16 %v1093, %v1090
    %v1163 = vpack.c.bf16 %v1101, %v1098
    %v1164 = vpack.c.bf16 %v1109, %v1106
    %v1165 = vpack.c.bf16 %v1117, %v1114
    %v1166 = vpack.c.bf16 %v1125, %v1122
    %v1167 = vpack.c.bf16 %v1133, %v1130
    %v1200 = vunpack.c.l.b16 %v1136
    %v1201 = vunpack.c.h.b16 %v1136
    %v1202 = vunpack.c.l.b16 %v1137
    %v1203 = vunpack.c.h.b16 %v1137
    %v1204 = vunpack.c.l.b16 %v1138
    %v1205 = vunpack.c.h.b16 %v1138
    %v1206 = vunpack.c.l.b16 %v1139
    %v1207 = vunpack.c.h.b16 %v1139
    %v1208 = vunpack.c.l.b16 %v1140
    %v1209 = vunpack.c.h.b16 %v1140
    %v1210 = vunpack.c.l.b16 %v1141
    %v1211 = vunpack.c.h.b16 %v1141
    %v1212 = vunpack.c.l.b16 %v1142
    %v1213 = vunpack.c.h.b16 %v1142
    %v1214 = vunpack.c.l.b16 %v1143
    %v1215 = vunpack.c.h.b16 %v1143
    %v1216 = vunpack.c.l.b16 %v1144
    %v1217 = vunpack.c.h.b16 %v1144
    %v1218 = vunpack.c.l.b16 %v1145
    %v1219 = vunpack.c.h.b16 %v1145
    %v1220 = vunpack.c.l.b16 %v1146
    %v1221 = vunpack.c.h.b16 %v1146
    %v1222 = vunpack.c.l.b16 %v1147
    %v1223 = vunpack.c.h.b16 %v1147
    %v1224 = vunpack.c.l.b16 %v1148
    %v1225 = vunpack.c.h.b16 %v1148
    %v1226 = vunpack.c.l.b16 %v1149
    %v1227 = vunpack.c.h.b16 %v1149
    %v1228 = vunpack.c.l.b16 %v1150
    %v1229 = vunpack.c.h.b16 %v1150
    %v1230 = vunpack.c.l.b16 %v1151
    %v1231 = vunpack.c.h.b16 %v1151
    %v1232 = vunpack.c.l.b16 %v1152
    %v1233 = vunpack.c.h.b16 %v1152
    %v1234 = vunpack.c.l.b16 %v1153
    %v1235 = vunpack.c.h.b16 %v1153
    %v1236 = vunpack.c.l.b16 %v1154
    %v1237 = vunpack.c.h.b16 %v1154
    %v1238 = vunpack.c.l.b16 %v1155
    %v1239 = vunpack.c.h.b16 %v1155
    %v1240 = vunpack.c.l.b16 %v1156
    %v1241 = vunpack.c.h.b16 %v1156
    %v1242 = vunpack.c.l.b16 %v1157
    %v1243 = vunpack.c.h.b16 %v1157
    %v1244 = vunpack.c.l.b16 %v1158
    %v1245 = vunpack.c.h.b16 %v1158
    %v1246 = vunpack.c.l.b16 %v1159
    %v1247 = vunpack.c.h.b16 %v1159
    %v1248 = vunpack.c.l.b16 %v1160
    %v1249 = vunpack.c.h.b16 %v1160
    %v1250 = vunpack.c.l.b16 %v1161
    %v1251 = vunpack.c.h.b16 %v1161
    %v1252 = vunpack.c.l.b16 %v1162
    %v1253 = vunpack.c.h.b16 %v1162
    %v1254 = vunpack.c.l.b16 %v1163
    %v1255 = vunpack.c.h.b16 %v1163
    %v1256 = vunpack.c.l.b16 %v1164
    %v1257 = vunpack.c.h.b16 %v1164
    %v1258 = vunpack.c.l.b16 %v1165
    %v1259 = vunpack.c.h.b16 %v1165
    %v1260 = vunpack.c.l.b16 %v1166
    %v1261 = vunpack.c.h.b16 %v1166
    %v1262 = vunpack.c.l.b16 %v1167
    %v1263 = vunpack.c.h.b16 %v1167
    %v1264 = vpack.c.b16 %v1200, %v1200
    %v1265 = vpack.c.b16 %v1201, %v1201
    %v1266 = vpack.c.b16 %v1202, %v1202
    %v1267 = vpack.c.b16 %v1203, %v1203
    %v1268 = vpack.c.b16 %v1204, %v1204
    %v1269 = vpack.c.b16 %v1205, %v1205
    %v1270 = vpack.c.b16 %v1206, %v1206
    %v1271 = vpack.c.b16 %v1207, %v1207
    %v1272 = vpack.c.b16 %v1208, %v1208
    %v1273 = vpack.c.b16 %v1209, %v1209
    %v1274 = vpack.c.b16 %v1210, %v1210
    %v1275 = vpack.c.b16 %v1211, %v1211
    %v1276 = vpack.c.b16 %v1212, %v1212
    %v1277 = vpack.c.b16 %v1213, %v1213
    %v1278 = vpack.c.b16 %v1214, %v1214
    %v1279 = vpack.c.b16 %v1215, %v1215
    %v1280 = vpack.c.b16 %v1216, %v1216
    %v1281 = vpack.c.b16 %v1217, %v1217
    %v1282 = vpack.c.b16 %v1218, %v1218
    %v1283 = vpack.c.b16 %v1219, %v1219
    %v1284 = vpack.c.b16 %v1220, %v1220
    %v1285 = vpack.c.b16 %v1221, %v1221
    %v1286 = vpack.c.b16 %v1222, %v1222
    %v1287 = vpack.c.b16 %v1223, %v1223
    %v1288 = vpack.c.b16 %v1224, %v1224
    %v1289 = vpack.c.b16 %v1225, %v1225
    %v1290 = vpack.c.b16 %v1226, %v1226
    %v1291 = vpack.c.b16 %v1227, %v1227
    %v1292 = vpack.c.b16 %v1228, %v1228
    %v1293 = vpack.c.b16 %v1229, %v1229
    %v1294 = vpack.c.b16 %v1230, %v1230
    %v1295 = vpack.c.b16 %v1231, %v1231
    %v1296 = vpack.c.b16 %v1232, %v1232
    %v1297 = vpack.c.b16 %v1233, %v1233
    %v1298 = vpack.c.b16 %v1234, %v1234
    %v1299 = vpack.c.b16 %v1235, %v1235
    %v1300 = vpack.c.b16 %v1236, %v1236
    %v1301 = vpack.c.b16 %v1237, %v1237
    %v1302 = vpack.c.b16 %v1238, %v1238
    %v1303 = vpack.c.b16 %v1239, %v1239
    %v1304 = vpack.c.b16 %v1240, %v1240
    %v1305 = vpack.c.b16 %v1241, %v1241
    %v1306 = vpack.c.b16 %v1242, %v1242
    %v1307 = vpack.c.b16 %v1243, %v1243
    %v1308 = vpack.c.b16 %v1244, %v1244
    %v1309 = vpack.c.b16 %v1245, %v1245
    %v1310 = vpack.c.b16 %v1246, %v1246
    %v1311 = vpack.c.b16 %v1247, %v1247
    %v1312 = vpack.c.b16 %v1248, %v1248
    %v1313 = vpack.c.b16 %v1249, %v1249
    %v1314 = vpack.c.b16 %v1250, %v1250
    %v1315 = vpack.c.b16 %v1251, %v1251
    %v1316 = vpack.c.b16 %v1252, %v1252
    %v1317 = vpack.c.b16 %v1253, %v1253
    %v1318 = vpack.c.b16 %v1254, %v1254
    %v1319 = vpack.c.b16 %v1255, %v1255
    %v1320 = vpack.c.b16 %v1256, %v1256
    %v1321 = vpack.c.b16 %v1257, %v1257
    %v1322 = vpack.c.b16 %v1258, %v1258
    %v1323 = vpack.c.b16 %v1259, %v1259
    %v1324 = vpack.c.b16 %v1260, %v1260
    %v1325 = vpack.c.b16 %v1261, %v1261
    %v1326 = vpack.c.b16 %v1262, %v1262
    %v1327 = vpack.c.b16 %v1263, %v1263
    %1392 = vst [vmem:[#allocation2] sm:$0xf] %v1264
    %1393 = vst [vmem:[#allocation2 + $0x4] sm:$0xf] %v1265
    %1394 = vst [vmem:[#allocation2 + $0x8] sm:$0xf] %v1266
    %1395 = vst [vmem:[#allocation2 + $0xc] sm:$0xf] %v1267
    %1396 = vst [vmem:[#allocation2 + $0x10] sm:$0xf] %v1268
    %1397 = vst [vmem:[#allocation2 + $0x14] sm:$0xf] %v1269
    %1398 = vst [vmem:[#allocation2 + $0x18] sm:$0xf] %v1270
    %1399 = vst [vmem:[#allocation2 + $0x1c] sm:$0xf] %v1271
    %1400 = vst [vmem:[#allocation2 + $0x20] sm:$0xf] %v1272
    %1401 = vst [vmem:[#allocation2 + $0x24] sm:$0xf] %v1273
    %1402 = vst [vmem:[#allocation2 + $0x28] sm:$0xf] %v1274
    %1403 = vst [vmem:[#allocation2 + $0x2c] sm:$0xf] %v1275
    %1404 = vst [vmem:[#allocation2 + $0x30] sm:$0xf] %v1276
    %1405 = vst [vmem:[#allocation2 + $0x34] sm:$0xf] %v1277
    %1406 = vst [vmem:[#allocation2 + $0x38] sm:$0xf] %v1278
    %1407 = vst [vmem:[#allocation2 + $0x3c] sm:$0xf] %v1279
    %1408 = vst [vmem:[#allocation2 + $0x40] sm:$0xf] %v1280
    %1409 = vst [vmem:[#allocation2 + $0x44] sm:$0xf] %v1281
    %1410 = vst [vmem:[#allocation2 + $0x48] sm:$0xf] %v1282
    %1411 = vst [vmem:[#allocation2 + $0x4c] sm:$0xf] %v1283
    %1412 = vst [vmem:[#allocation2 + $0x50] sm:$0xf] %v1284
    %1413 = vst [vmem:[#allocation2 + $0x54] sm:$0xf] %v1285
    %1414 = vst [vmem:[#allocation2 + $0x58] sm:$0xf] %v1286
    %1415 = vst [vmem:[#allocation2 + $0x5c] sm:$0xf] %v1287
    %1416 = vst [vmem:[#allocation2 + $0x60] sm:$0xf] %v1288
    %1417 = vst [vmem:[#allocation2 + $0x64] sm:$0xf] %v1289
    %1418 = vst [vmem:[#allocation2 + $0x68] sm:$0xf] %v1290
    %1419 = vst [vmem:[#allocation2 + $0x6c] sm:$0xf] %v1291
    %1420 = vst [vmem:[#allocation2 + $0x70] sm:$0xf] %v1292
    %1421 = vst [vmem:[#allocation2 + $0x74] sm:$0xf] %v1293
    %1422 = vst [vmem:[#allocation2 + $0x78] sm:$0xf] %v1294
    %1423 = vst [vmem:[#allocation2 + $0x7c] sm:$0xf] %v1295
    %1424 = vst [vmem:[#allocation2 + $0x80] sm:$0xf] %v1296
    %1425 = vst [vmem:[#allocation2 + $0x84] sm:$0xf] %v1297
    %1426 = vst [vmem:[#allocation2 + $0x88] sm:$0xf] %v1298
    %1427 = vst [vmem:[#allocation2 + $0x8c] sm:$0xf] %v1299
    %1428 = vst [vmem:[#allocation2 + $0x90] sm:$0xf] %v1300
    %1429 = vst [vmem:[#allocation2 + $0x94] sm:$0xf] %v1301
    %1430 = vst [vmem:[#allocation2 + $0x98] sm:$0xf] %v1302
    %1431 = vst [vmem:[#allocation2 + $0x9c] sm:$0xf] %v1303
    %1432 = vst [vmem:[#allocation2 + $0xa0] sm:$0xf] %v1304
    %1433 = vst [vmem:[#allocation2 + $0xa4] sm:$0xf] %v1305
    %1434 = vst [vmem:[#allocation2 + $0xa8] sm:$0xf] %v1306
    %1435 = vst [vmem:[#allocation2 + $0xac] sm:$0xf] %v1307
    %1436 = vst [vmem:[#allocation2 + $0xb0] sm:$0xf] %v1308
    %1437 = vst [vmem:[#allocation2 + $0xb4] sm:$0xf] %v1309
    %1438 = vst [vmem:[#allocation2 + $0xb8] sm:$0xf] %v1310
    %1439 = vst [vmem:[#allocation2 + $0xbc] sm:$0xf] %v1311
    %1440 = vst [vmem:[#allocation2 + $0xc0] sm:$0xf] %v1312
    %1441 = vst [vmem:[#allocation2 + $0xc4] sm:$0xf] %v1313
    %1442 = vst [vmem:[#allocation2 + $0xc8] sm:$0xf] %v1314
    %1443 = vst [vmem:[#allocation2 + $0xcc] sm:$0xf] %v1315
    %1444 = vst [vmem:[#allocation2 + $0xd0] sm:$0xf] %v1316
    %1445 = vst [vmem:[#allocation2 + $0xd4] sm:$0xf] %v1317
    %1446 = vst [vmem:[#allocation2 + $0xd8] sm:$0xf] %v1318
    %1447 = vst [vmem:[#allocation2 + $0xdc] sm:$0xf] %v1319
    %1448 = vst [vmem:[#allocation2 + $0xe0] sm:$0xf] %v1320
    %1449 = vst [vmem:[#allocation2 + $0xe4] sm:$0xf] %v1321
    %1450 = vst [vmem:[#allocation2 + $0xe8] sm:$0xf] %v1322
    %1451 = vst [vmem:[#allocation2 + $0xec] sm:$0xf] %v1323
    %1452 = vst [vmem:[#allocation2 + $0xf0] sm:$0xf] %v1324
    %1453 = vst [vmem:[#allocation2 + $0xf4] sm:$0xf] %v1325
    %1454 = vst [vmem:[#allocation2 + $0xf8] sm:$0xf] %v1326
    %1455 = vst [vmem:[#allocation2 + $0xfc] sm:$0xf] %v1327
    // Predicated region
    $region22: #{tpu_custom_call.1} parent=1 // pred_check
      _
    $region23: #{tpu_custom_call.1} parent=1 // pred_check_branch
      %1457 = sbr.rel (0) target = $region25
    $region24: #{tpu_custom_call.1} parent=1 // pred_region
      %s1459 = ssub.s32 4096, 4096
      %1460 = vsyncadd [#allocation3], %s1459
      %s1461 = sshll.u32 [#allocation2], 4
      %s1462 = int_to_ptr.vmem [resolvable:$true] %s1461
      %1467 = dma.vmem_to_hbm [thread:$0]  %s1462, 4096, %s5, [#allocation3], 64, 64, 4
    $region25: #{tpu_custom_call.1} parent=1 // pred_fallthru
      _
    // Predicated region
    $region26: #{tpu_custom_call.1} parent=1 // pred_check
      _
    $region27: #{tpu_custom_call.1} parent=1 // pred_check_branch
      %1469 = sbr.rel (0) target = $region29
    $region28: #{tpu_custom_call.1} parent=1 // pred_region
      %1470 = dma.done [#allocation3], 4096
    $region29: #{tpu_custom_call.1} parent=1 // pred_fallthru
      _
    %1471 = vsyncpa [#allocation3], 1

</llo_original>
